<compile_context>
chip_gen: v7x
topology: tpu7x:2x2x1
jax: 0.10.0
libtpu: 0.0.40
codegen_flags: <defaults>
</compile_context>

<pallas_src>
import functools

import jax
import jax.numpy as jnp
from jax.experimental import pallas as pl
from jax.experimental.pallas import tpu as pltpu


def _pool_kernel_full_h(emb_ref, mask_ref, out_ref, *, normalize):
    # emb_ref : (TB, S, H)   model dtype (e.g. bf16)
    # mask_ref: (TB, 1, S)   same dtype (0/1 values, exact)
    # out_ref : (TB, H)      f32
    summed = jnp.einsum(
        "bks,bsh->bkh", mask_ref[...], emb_ref[...],
        preferred_element_type=jnp.float32)[:, 0, :]            # (TB, H)
    if normalize:
        # mean-pool's 1/count cancels under L2 normalization -> skip it.
        # (all-zero mask rows give the zero vector, matching torch.)
        sq = jnp.sum(summed * summed, axis=1, keepdims=True)    # (TB, 1)
        out = summed * jax.lax.rsqrt(jnp.maximum(sq, 1e-24))
    else:
        cnt = jnp.sum(mask_ref[...].astype(jnp.float32), axis=2)  # (TB, 1)
        out = summed / jnp.maximum(cnt, 1e-9)  # torch.clamp(min=1e-9)
    out_ref[...] = out.astype(out_ref.dtype)                    # single (TB,H) store


def _pool_kernel_h_tiled(emb_ref, mask_ref, out_ref):
    # emb_ref : (TB, S, TH); mask_ref: (TB, 1, S); out_ref: (TB, TH) f32
    summed = jnp.einsum(
        "bks,bsh->bkh", mask_ref[...], emb_ref[...],
        preferred_element_type=jnp.float32)[:, 0, :]             # (TB, TH)
    cnt = jnp.sum(mask_ref[...].astype(jnp.float32), axis=2)     # (TB, 1)
    out_ref[...] = (summed / jnp.maximum(cnt, 1e-9)).astype(out_ref.dtype)


def _round_up(x, m):
    return ((x + m - 1) // m) * m


def _vmem_budget_and_limit():
    """Per-generation VMEM sizing (v5e/v6e: 128 MiB, v7x: 64 MiB per TC)."""
    cap = 64 * 1024 * 1024  # conservative default (v7x per-TC)
    try:
        info = pltpu.get_tpu_info()
        cap = int(getattr(info, "vmem_capacity_bytes", cap) or cap)
    except Exception:
        pass
    budget = min(cap // 2, 80 * 1024 * 1024)      # includes 2x double-buffering
    limit = min((cap * 3) // 4, 96 * 1024 * 1024)
    return budget, limit


def _choose_blocks(B, S, H, itemsize, vmem_budget_bytes):
    """Pick (row_block, h_block).

    Row block is a multiple of 8 (or == B when B <= 8), clamped to the padded
    batch, and capped at half the padded batch for B >= 16 so the parallel
    grid has >= 2 steps (v7x megacore).  H is tiled (multiples of 128) only
    when even the minimum row block would not fit the VMEM budget.
    """
    b_full = B if B <= 8 else _round_up(B, 8)
    b_cap = b_full
    if B >= 16:
        b_cap = min(b_cap, max(8, b_full // 2))
    min_rows = B if B <= 8 else 8

    def rows_that_fit(th):
        # double-buffered emb block dominates; mask (tb,1,S) pads sublane 1->8.
        per_row = 2 * S * th * itemsize + 2 * 8 * S * itemsize + 2 * th * 4
        return max(vmem_budget_bytes // per_row, 0)

    rows = rows_that_fit(H)
    if rows >= min_rows:
        tb = B if B <= 8 else min(b_cap, (rows // 8) * 8)
        return tb, H

    # Fallback for large S*H: tile the hidden axis (>= 128 lanes per tile).
    th = H
    while th > 128 and rows_that_fit(th) < min_rows:
        th = max(128, _round_up(th // 2, 128))
    return min_rows, th


def sentence_embedding_pool(token_embeddings, attention_mask, normalize=True,
                            vmem_budget_bytes=None):
    """token_embeddings: [B, S, H] (bf16/f32); attention_mask: [B, S] (int/float)."""
    if attention_mask.ndim == 3 and attention_mask.shape[-1] == 1:
        attention_mask = attention_mask[..., 0]
    B, S, H = token_embeddings.shape
    # Keep embeddings in their native dtype (no HBM-doubling f32 upcast).
    # Mask values are 0/1 so casting to the model dtype is exact; (B,1,S) keeps
    # S lane-major and one row per sublane group -> no relayout before the MXU.
    mask = attention_mask.astype(token_embeddings.dtype).reshape(B, 1, S)

    budget, limit = _vmem_budget_and_limit()
    if vmem_budget_bytes is not None:
        budget = vmem_budget_bytes
    tb, th = _choose_blocks(B, S, H, token_embeddings.dtype.itemsize, budget)

    if th == H:
        return pl.pallas_call(
            functools.partial(_pool_kernel_full_h, normalize=normalize),
            out_shape=jax.ShapeDtypeStruct((B, H), jnp.float32),
            grid=(pl.cdiv(B, tb),),
            in_specs=[
                pl.BlockSpec((tb, S, H), lambda i: (i, 0, 0)),
                pl.BlockSpec((tb, 1, S), lambda i: (i, 0, 0)),
            ],
            out_specs=pl.BlockSpec((tb, H), lambda i: (i, 0)),
            compiler_params=pltpu.CompilerParams(
                dimension_semantics=("parallel",),  # v7x: shard row blocks over TCs
                vmem_limit_bytes=limit,
            ),
        )(token_embeddings, mask)

    # Large S*H fallback: tile H.  The kernel emits the masked mean per H-tile;
    # L2 normalization needs the full hidden axis, so it is applied to the
    # tiny [B, H] pooled result outside the kernel.
    pooled = pl.pallas_call(
        _pool_kernel_h_tiled,
        out_shape=jax.ShapeDtypeStruct((B, H), jnp.float32),
        grid=(pl.cdiv(B, tb), pl.cdiv(H, th)),
        in_specs=[
            pl.BlockSpec((tb, S, th), lambda i, j: (i, 0, j)),
            pl.BlockSpec((tb, 1, S), lambda i, j: (i, 0, 0)),
        ],
        out_specs=pl.BlockSpec((tb, th), lambda i, j: (i, j)),
        compiler_params=pltpu.CompilerParams(
            dimension_semantics=("parallel", "parallel"),
            vmem_limit_bytes=limit,
        ),
    )(token_embeddings, mask)
    if normalize:
        sq = jnp.sum(pooled * pooled, axis=1, keepdims=True)
        pooled = pooled * jax.lax.rsqrt(jnp.maximum(sq, 1e-24))
    return pooled


if __name__ == "__main__":
    # Small synthetic shapes consistent with a tokenized sentence batch:
    # batch=16 sentences, padded max_length=128, hidden=128; model outputs bf16.
    B, S, H = 16, 128, 128
    key = jax.random.PRNGKey(0)
    k_emb, k_len, k_emb2 = jax.random.split(key, 3)

    token_embeddings = jax.random.normal(
        k_emb, (B, S, H), dtype=jnp.float32).astype(jnp.bfloat16)
    lengths = jax.random.randint(k_len, (B,), 1, S + 1)
    attention_mask = (jnp.arange(S)[None, :] < lengths[:, None]).astype(jnp.int32)

    # Pure-JAX reference (f32 math on the same bf16 inputs).
    emb32 = token_embeddings.astype(jnp.float32)
    m32 = attention_mask.astype(jnp.float32)[:, :, None]
    ref_pool = jnp.sum(emb32 * m32, axis=1) / jnp.maximum(jnp.sum(m32, axis=1), 1e-9)
    ref_norm = ref_pool / jnp.maximum(
        jnp.linalg.norm(ref_pool, axis=1, keepdims=True), 1e-12)

    out = jax.block_until_ready(
        sentence_embedding_pool(token_embeddings, attention_mask, normalize=True))
    out_raw = jax.block_until_ready(
        sentence_embedding_pool(token_embeddings, attention_mask, normalize=False))
    assert out.shape == (B, H) and out_raw.shape == (B, H)
    assert jnp.allclose(out, ref_norm, atol=1e-4, rtol=1e-4)
    assert jnp.allclose(out_raw, ref_pool, atol=1e-4, rtol=1e-4)

    # Exercise the H-tiled fallback (large S*H) with a forced tiny VMEM budget.
    H2 = 256
    token_embeddings2 = jax.random.normal(
        k_emb2, (B, S, H2), dtype=jnp.float32).astype(jnp.bfloat16)
    emb32_2 = token_embeddings2.astype(jnp.float32)
    ref_pool2 = jnp.sum(emb32_2 * m32, axis=1) / jnp.maximum(jnp.sum(m32, axis=1), 1e-9)
    ref_norm2 = ref_pool2 / jnp.maximum(
        jnp.linalg.norm(ref_pool2, axis=1, keepdims=True), 1e-12)
    out_tiled = jax.block_until_ready(
        sentence_embedding_pool(token_embeddings2, attention_mask,
                                normalize=True, vmem_budget_bytes=1 << 20))
    assert out_tiled.shape == (B, H2)
    assert jnp.allclose(out_tiled, ref_norm2, atol=1e-4, rtol=1e-4)

    print("KERNEL_OK")
</pallas_src>

<mosaic_0001>
module attributes {stable_mosaic.version = 11 : i64} {
  func.func @_pool_kernel_full_h(%arg0: i32, %arg1: memref<8x128x128xbf16, #tpu.memory_space<vmem>>, %arg2: memref<8x1x128xbf16, #tpu.memory_space<vmem>>, %arg3: memref<8x128xf32, #tpu.memory_space<vmem>>) attributes {dimension_semantics = [#tpu.dimension_semantics<parallel>], iteration_bounds = array<i64: 2>, scalar_prefetch = 0 : i64, scratch_operands = 0 : i64, tpu.core_type = #tpu.core_type<tc>, window_params = [{transform_indices = @transform_0, window_bounds = array<i64: 8, 128, 128>}, {transform_indices = @transform_1, window_bounds = array<i64: 8, 1, 128>}, {transform_indices = @transform_2, window_bounds = array<i64: 8, 128>}]} {
    %c0 = arith.constant 0 : index
    %c0_0 = arith.constant 0 : index
    %c0_1 = arith.constant 0 : index
    %0 = vector.load %arg2[%c0, %c0_0, %c0_1] : memref<8x1x128xbf16, #tpu.memory_space<vmem>>, vector<8x1x128xbf16>
    %c0_2 = arith.constant 0 : index
    %c0_3 = arith.constant 0 : index
    %c0_4 = arith.constant 0 : index
    %1 = vector.load %arg1[%c0_2, %c0_3, %c0_4] : memref<8x128x128xbf16, #tpu.memory_space<vmem>>, vector<8x128x128xbf16>
    "tpu.trace_start"() <{level = 10 : i32, message = "bks,bsh->bkh"}> : () -> ()
    %cst = arith.constant dense<0.000000e+00> : vector<8x1x128xf32>
    %2 = tpu.matmul %0, %1, %cst {dimension_numbers = #tpu.dot_dimension_numbers<[2], [1], [1], [2], [0, 0, 0, 1, 1, 2], [0], [0]>} : vector<8x1x128xbf16>, vector<8x128x128xbf16>, vector<8x1x128xf32> -> vector<8x1x128xf32>
    "tpu.trace_stop"() : () -> ()
    %3 = vector.shape_cast %2 : vector<8x1x128xf32> to vector<8x128xf32>
    %4 = arith.mulf %3, %3 : vector<8x128xf32>
    %cst_5 = arith.constant dense<0.000000e+00> : vector<8xf32>
    %5 = vector.multi_reduction <add>, %4, %cst_5 [1] : vector<8x128xf32> to vector<8xf32>
    %6 = vector.shape_cast %5 : vector<8xf32> to vector<8x1xf32>
    %cst_6 = arith.constant 1.000000e-24 : f32
    %7 = vector.broadcast %cst_6 : f32 to vector<8x1xf32>
    %8 = arith.maximumf %6, %7 : vector<8x1xf32>
    %9 = math.rsqrt %8 : vector<8x1xf32>
    %10 = vector.broadcast %9 : vector<8x1xf32> to vector<8x128xf32>
    %11 = arith.mulf %3, %10 : vector<8x128xf32>
    %c0_7 = arith.constant 0 : index
    %c0_8 = arith.constant 0 : index
    %12 = vector.load %arg3[%c0_7, %c0_8] : memref<8x128xf32, #tpu.memory_space<vmem>>, vector<8x128xf32>
    tpu.vector_store %arg3[%c0_7, %c0_8], %11 {strides = array<i32>} : memref<8x128xf32, #tpu.memory_space<vmem>>, vector<8x128xf32>,
    return
  }
  func.func @transform_0(%arg0: i32) -> (i32, i32, i32) {
    %c0_i32 = arith.constant 0 : i32
    %c0_i32_0 = arith.constant 0 : i32
    %c0_i32_1 = arith.constant 0 : i32
    return %arg0, %c0_i32, %c0_i32_0 : i32, i32, i32
  }
  func.func @transform_1(%arg0: i32) -> (i32, i32, i32) {
    %c0_i32 = arith.constant 0 : i32
    %c0_i32_0 = arith.constant 0 : i32
    %c0_i32_1 = arith.constant 0 : i32
    return %arg0, %c0_i32, %c0_i32_0 : i32, i32, i32
  }
  func.func @transform_2(%arg0: i32) -> (i32, i32) {
    %c0_i32 = arith.constant 0 : i32
    %c0_i32_0 = arith.constant 0 : i32
    return %arg0, %c0_i32 : i32, i32
  }
}

</mosaic_0001>

<llo_original>
// kernel: tpu_custom_call.1
$region0: #{tpu_custom_call.1}
  #allocation0 [shape = 'u32[]', space=smem, size = 0x4, offset = 0x4, fixed_abs, tag = 'smem constant byte address 0x4 - core index']
  #allocation1 [shape = 'u32[144,128]{1,0:T(1,128)}', space=vmem, size = 0x12000, scoped, tag = 'internal scratch']
  %s0 = inlined_call_operand.hbm [shape: bf16[16,128,128], index: 0, kind: input, shape index: {}]
  %s1 = inlined_call_operand.vmem [shape: bf16[16,1,128], index: 1, kind: input, shape index: {}]
  %s2 = inlined_call_operand.hbm [shape: f32[16,128], index: 2, kind: output, shape index: {}]
  %s3 = sld [smem:[#allocation0]]
  $region45: #{tpu_custom_call.1} parent=0
    _
  %s5 = ssub.s32 1, %s3
  %s6 = scalar_select 0, %s5, %s3
  $region1: #{tpu_custom_call.1} parent=0
    #allocation2 [shape = 'u8[524288]{0}', space=vmem, size = 0x80000, scoped, tag = 'input window, operand 0']
    #allocation3 [shape = 's32[2]{0}', space=sflag, size = 0x8, scoped, tag = 'scoped memory for tpu_custom_call.1']
    #allocation4 [shape = 's32[2]{0}', space=sflag, size = 0x8, scoped, tag = 'scoped memory for tpu_custom_call.1']
    #allocation5 [shape = 'u8[8192]{0}', space=vmem, size = 0x2000, scoped, tag = 'output window, operand 0']
    %7 = vsyncpa [#allocation3], 0
    %s8 = scalar_lea.sflag [#allocation3], 1
    %9 = vsyncpa %s8, 0
    %10 = vsyncpa [#allocation4], 0
    %s11 = scalar_lea.sflag [#allocation4], 1
    %12 = vsyncpa %s11, 0
    loop: start=0, step=1, limit=4
    $region2: #{tpu_custom_call.1} parent=1 // loop_pre_header
      _
    $region3: #{tpu_custom_call.1} parent=1 // loop_header
      %s14 = sphi 0, %s18
      %p15 = scmp.ge.s32.totalorder %s14, 4
      %s24 = sphi 0, %s26
      %s27 = sphi 0, %s24
      %s28 = sphi 0, %s27
      %s44 = sphi 0, %s28
      %s50 = sphi 0, %s52
      %s53 = sphi 0, %s50
      %s54 = sphi 0, %s53
      %s70 = sphi 0, %s54
      %s76 = sphi 0, %s78
      %s79 = sphi 0, %s76
      %s80 = sphi 0, %s79
      %s96 = sphi 0, %s80
    $region4: #{tpu_custom_call.1} parent=1 // loop_header_branch
      %17 = sbr.rel (%p15) target = $region8
    $region5: #{tpu_custom_call.1} parent=1 // loop_body
      %s19 = ssub.s32 %s14, 1
      %s20 = ssub.s32 %s14, 2
      %s21 = sadd.s32 %s14, 1
      %s22 = ssub.s32 %s14, %s21
      %p23 = scmp.eq.s32.totalorder %s22, 0
      %s25 = sadd.s32 %s24, 1
      %s26 = scalar_select %p23, %s24, %s25
      %p29 = pneg %p23
      %p30 = scmp.eq.s32.totalorder %s14, 1
      %p31 = por %p29, %p30
      %p32 = scmp.ne.s32.totalorder %s24, %s27
      %p33 = scmp.eq.s32.totalorder %s14, 0
      %p34 = por %p32, %p33
      %p35 = scmp.ne.s32.totalorder %s24, %s27
      %p36 = scmp.eq.s32.totalorder %s19, 1
      %p37 = por %p35, %p36
      %p38 = scmp.ne.s32.totalorder %s27, %s28
      %p39 = scmp.eq.s32.totalorder %s19, 0
      %p40 = por %p38, %p39
      %p41 = scmp.ne.s32.totalorder %s27, %s28
      %p42 = scmp.eq.s32.totalorder %s20, 1
      %p43 = por %p41, %p42
      %p45 = scmp.ne.s32.totalorder %s28, %s44
      %p46 = scmp.eq.s32.totalorder %s20, 0
      %p47 = por %p45, %p46
      %s48 = ssub.s32 %s14, %s21
      %p49 = scmp.eq.s32.totalorder %s48, 0
      %s51 = sadd.s32 %s50, 1
      %s52 = scalar_select %p49, %s50, %s51
      %p55 = pneg %p49
      %p56 = scmp.eq.s32.totalorder %s14, 1
      %p57 = por %p55, %p56
      %p58 = scmp.ne.s32.totalorder %s50, %s53
      %p59 = scmp.eq.s32.totalorder %s14, 0
      %p60 = por %p58, %p59
      %p61 = scmp.ne.s32.totalorder %s50, %s53
      %p62 = scmp.eq.s32.totalorder %s19, 1
      %p63 = por %p61, %p62
      %p64 = scmp.ne.s32.totalorder %s53, %s54
      %p65 = scmp.eq.s32.totalorder %s19, 0
      %p66 = por %p64, %p65
      %p67 = scmp.ne.s32.totalorder %s53, %s54
      %p68 = scmp.eq.s32.totalorder %s20, 1
      %p69 = por %p67, %p68
      %p71 = scmp.ne.s32.totalorder %s54, %s70
      %p72 = scmp.eq.s32.totalorder %s20, 0
      %p73 = por %p71, %p72
      %s74 = ssub.s32 %s14, %s21
      %p75 = scmp.eq.s32.totalorder %s74, 0
      %s77 = sadd.s32 %s76, 1
      %s78 = scalar_select %p75, %s76, %s77
      %p81 = pneg %p75
      %p82 = scmp.eq.s32.totalorder %s14, 1
      %p83 = por %p81, %p82
      %p84 = scmp.ne.s32.totalorder %s76, %s79
      %p85 = scmp.eq.s32.totalorder %s14, 0
      %p86 = por %p84, %p85
      %p87 = scmp.ne.s32.totalorder %s76, %s79
      %p88 = scmp.eq.s32.totalorder %s19, 1
      %p89 = por %p87, %p88
      %p90 = scmp.ne.s32.totalorder %s79, %s80
      %p91 = scmp.eq.s32.totalorder %s19, 0
      %p92 = por %p90, %p91
      %p93 = scmp.ne.s32.totalorder %s79, %s80
      %p94 = scmp.eq.s32.totalorder %s20, 1
      %p95 = por %p93, %p94
      %p97 = scmp.ne.s32.totalorder %s80, %s96
      %p98 = scmp.eq.s32.totalorder %s20, 0
      %p99 = por %p97, %p98
      %p100 = scmp.le.s32.totalorder 1, %s14
      %p101 = scmp.lt.s32.totalorder %s14, 3
      %p102 = pnand %p100, %p101
      %p103 = pneg %p102
      // Predicated region
      $region9: #{tpu_custom_call.1} parent=5 // pred_check
        _
      $region10: #{tpu_custom_call.1} parent=5 // pred_check_branch
        %105 = sbr.rel (%p102) target = $region12
      $region11: #{tpu_custom_call.1} parent=5 // pred_region
        %s106 = ssub.s32 %s14, 1
      $region12: #{tpu_custom_call.1} parent=5 // pred_fallthru
        _
      %p107 = scmp.lt.s32.totalorder %s14, 2
      // Predicated region
      $region13: #{tpu_custom_call.1} parent=5 // pred_check
        %p108 = pneg %p107
      $region14: #{tpu_custom_call.1} parent=5 // pred_check_branch
        %110 = sbr.rel (%p108) target = $region16
      $region15: #{tpu_custom_call.1} parent=5 // pred_region
        // Predicated region
        $region17: #{tpu_custom_call.1} parent=15 // pred_check
          %p111 = pneg %p34
        $region18: #{tpu_custom_call.1} parent=15 // pred_check_branch
          %113 = sbr.rel (%p111) target = $region20
        $region19: #{tpu_custom_call.1} parent=15 // pred_region
          %s114 = sand.u32 %s24, 1
          %s115 = scalar_lea.sflag [#allocation3], %s114
          %s116 = sand.u32 %s24, 1
          %s117 = smul.addr %s116, 512
          %s118 = scalar_lea.vmem [#allocation2], %s117
          %s119 = smul.u32 8, %s14
          %s121 = ssub.s32 8192, 8192
          %122 = vsyncadd %s115, %s121
          %s123 = smul.addr %s119, 16
          %s124 = smul.addr %s123, 64
          %s125 = scalar_lea.hbm %s0, %s124
          %s126 = sshll.u32 %s118, 4
          %s127 = int_to_ptr.vmem [resolvable:$true] %s126
          %132 = dma.hbm_to_vmem [thread:$0]  %s125, 8192, %s127, %s115, 64, 64, 4
        $region20: #{tpu_custom_call.1} parent=15 // pred_fallthru
          _
        // Predicated region
        $region21: #{tpu_custom_call.1} parent=15 // pred_check
          %p133 = pneg %p60
        $region22: #{tpu_custom_call.1} parent=15 // pred_check_branch
          %135 = sbr.rel (%p133) target = $region24
        $region23: #{tpu_custom_call.1} parent=15 // pred_region
          %s136 = smul.u32 8, %s14
          %p137 = scmp.lt.s32.totalorder %s136, 15
          %s138 = scalar_select %p137, %s136, 15
          %s139 = scalar_lea.vmem %s1, %s138
          %s140 = smul.u32 8, %s14
        $region24: #{tpu_custom_call.1} parent=15 // pred_fallthru
          _
      $region16: #{tpu_custom_call.1} parent=5 // pred_fallthru
        _
      %p141 = scmp.le.s32.totalorder 1, %s14
      %p142 = scmp.lt.s32.totalorder %s14, 3
      %p143 = pnand %p141, %p142
      %p144 = pneg %p143
      // Predicated region
      $region25: #{tpu_custom_call.1} parent=5 // pred_check
        _
      $region26: #{tpu_custom_call.1} parent=5 // pred_check_branch
        %146 = sbr.rel (%p143) target = $region28
      $region27: #{tpu_custom_call.1} parent=5 // pred_region
        %s147 = ssub.s32 %s14, 1
        %s148 = sand.u32 %s27, 1
        %s149 = scalar_lea.sflag [#allocation3], %s148
        %s150 = sand.u32 %s27, 1
        %s151 = smul.addr %s150, 512
        %s152 = scalar_lea.vmem [#allocation2], %s151
        // Predicated region
        $region29: #{tpu_custom_call.1} parent=27 // pred_check
          %p153 = pneg %p40
        $region30: #{tpu_custom_call.1} parent=27 // pred_check_branch
          %155 = sbr.rel (%p153) target = $region32
        $region31: #{tpu_custom_call.1} parent=27 // pred_region
          %156 = dma.done %s149, 8192
        $region32: #{tpu_custom_call.1} parent=27 // pred_fallthru
          _
        %s157 = sand.u32 %s27, 1
        %s158 = scalar_lea.sflag [#allocation3], %s157
        %s159 = sand.u32 %s27, 1
        %s160 = smul.addr %s159, 512
        %s161 = scalar_lea.vmem [#allocation2], %s160
        %p162 = pneg %p40
        %p163 = pneg %p37
        %s164 = smul.u32 8, %s19
        %p165 = scmp.lt.s32.totalorder %s164, 15
        %s166 = scalar_select %p165, %s164, 15
        %s167 = scalar_lea.vmem %s1, %s166
        %p168 = pneg %p66
        %p169 = pneg %p63
        %p170 = pneg %p92
        %p171 = pneg %p89
        %s172 = sand.u32 %s79, 1
        %s173 = scalar_lea.sflag [#allocation4], %s172
        %s174 = sand.u32 %s79, 1
        %s175 = smul.addr %s174, 8
        %s176 = scalar_lea.vmem [#allocation5], %s175
        %s177 = smul.u32 8, %s19
        %s178 = smul.u32 8, %s19
        %p179 = scmp.lt.s32.totalorder %s178, 15
        %s180 = scalar_select %p179, %s178, 15
        %s181 = scalar_lea.vmem %s1, %s180
        %s182 = smul.u32 8, %s19
        %v184 = vld [vmem:[%s181] sm:$0x1]
        %v185 = vld [vmem:[%s181 + $0x1] sm:$0x1]
        %v186 = vld [vmem:[%s181 + $0x2] sm:$0x1]
        %v187 = vld [vmem:[%s181 + $0x3] sm:$0x1]
        %v188 = vld [vmem:[%s181 + $0x4] sm:$0x1]
        %v189 = vld [vmem:[%s181 + $0x5] sm:$0x1]
        %v190 = vld [vmem:[%s181 + $0x6] sm:$0x1]
        %v191 = vld [vmem:[%s181 + $0x7] sm:$0x1]
        %v192 = vld [vmem:[%s152] sm:$0xf]
        %v193 = vld [vmem:[%s152 + $0x4] sm:$0xf]
        %v194 = vld [vmem:[%s152 + $0x8] sm:$0xf]
        %v195 = vld [vmem:[%s152 + $0xc] sm:$0xf]
        %v196 = vld [vmem:[%s152 + $0x10] sm:$0xf]
        %v197 = vld [vmem:[%s152 + $0x14] sm:$0xf]
        %v198 = vld [vmem:[%s152 + $0x18] sm:$0xf]
        %v199 = vld [vmem:[%s152 + $0x1c] sm:$0xf]
        %v200 = vld [vmem:[%s152 + $0x20] sm:$0xf]
        %v201 = vld [vmem:[%s152 + $0x24] sm:$0xf]
        %v202 = vld [vmem:[%s152 + $0x28] sm:$0xf]
        %v203 = vld [vmem:[%s152 + $0x2c] sm:$0xf]
        %v204 = vld [vmem:[%s152 + $0x30] sm:$0xf]
        %v205 = vld [vmem:[%s152 + $0x34] sm:$0xf]
        %v206 = vld [vmem:[%s152 + $0x38] sm:$0xf]
        %v207 = vld [vmem:[%s152 + $0x3c] sm:$0xf]
        %v208 = vld [vmem:[%s152 + $0x40] sm:$0xf]
        %v209 = vld [vmem:[%s152 + $0x44] sm:$0xf]
        %v210 = vld [vmem:[%s152 + $0x48] sm:$0xf]
        %v211 = vld [vmem:[%s152 + $0x4c] sm:$0xf]
        %v212 = vld [vmem:[%s152 + $0x50] sm:$0xf]
        %v213 = vld [vmem:[%s152 + $0x54] sm:$0xf]
        %v214 = vld [vmem:[%s152 + $0x58] sm:$0xf]
        %v215 = vld [vmem:[%s152 + $0x5c] sm:$0xf]
        %v216 = vld [vmem:[%s152 + $0x60] sm:$0xf]
        %v217 = vld [vmem:[%s152 + $0x64] sm:$0xf]
        %v218 = vld [vmem:[%s152 + $0x68] sm:$0xf]
        %v219 = vld [vmem:[%s152 + $0x6c] sm:$0xf]
        %v220 = vld [vmem:[%s152 + $0x70] sm:$0xf]
        %v221 = vld [vmem:[%s152 + $0x74] sm:$0xf]
        %v222 = vld [vmem:[%s152 + $0x78] sm:$0xf]
        %v223 = vld [vmem:[%s152 + $0x7c] sm:$0xf]
        %v224 = vld [vmem:[%s152 + $0x80] sm:$0xf]
        %v225 = vld [vmem:[%s152 + $0x84] sm:$0xf]
        %v226 = vld [vmem:[%s152 + $0x88] sm:$0xf]
        %v227 = vld [vmem:[%s152 + $0x8c] sm:$0xf]
        %v228 = vld [vmem:[%s152 + $0x90] sm:$0xf]
        %v229 = vld [vmem:[%s152 + $0x94] sm:$0xf]
        %v230 = vld [vmem:[%s152 + $0x98] sm:$0xf]
        %v231 = vld [vmem:[%s152 + $0x9c] sm:$0xf]
        %v232 = vld [vmem:[%s152 + $0xa0] sm:$0xf]
        %v233 = vld [vmem:[%s152 + $0xa4] sm:$0xf]
        %v234 = vld [vmem:[%s152 + $0xa8] sm:$0xf]
        %v235 = vld [vmem:[%s152 + $0xac] sm:$0xf]
        %v236 = vld [vmem:[%s152 + $0xb0] sm:$0xf]
        %v237 = vld [vmem:[%s152 + $0xb4] sm:$0xf]
        %v238 = vld [vmem:[%s152 + $0xb8] sm:$0xf]
        %v239 = vld [vmem:[%s152 + $0xbc] sm:$0xf]
        %v240 = vld [vmem:[%s152 + $0xc0] sm:$0xf]
        %v241 = vld [vmem:[%s152 + $0xc4] sm:$0xf]
        %v242 = vld [vmem:[%s152 + $0xc8] sm:$0xf]
        %v243 = vld [vmem:[%s152 + $0xcc] sm:$0xf]
        %v244 = vld [vmem:[%s152 + $0xd0] sm:$0xf]
        %v245 = vld [vmem:[%s152 + $0xd4] sm:$0xf]
        %v246 = vld [vmem:[%s152 + $0xd8] sm:$0xf]
        %v247 = vld [vmem:[%s152 + $0xdc] sm:$0xf]
        %v248 = vld [vmem:[%s152 + $0xe0] sm:$0xf]
        %v249 = vld [vmem:[%s152 + $0xe4] sm:$0xf]
        %v250 = vld [vmem:[%s152 + $0xe8] sm:$0xf]
        %v251 = vld [vmem:[%s152 + $0xec] sm:$0xf]
        %v252 = vld [vmem:[%s152 + $0xf0] sm:$0xf]
        %v253 = vld [vmem:[%s152 + $0xf4] sm:$0xf]
        %v254 = vld [vmem:[%s152 + $0xf8] sm:$0xf]
        %v255 = vld [vmem:[%s152 + $0xfc] sm:$0xf]
        %v256 = vld [vmem:[%s152 + $0x100] sm:$0xf]
        %v257 = vld [vmem:[%s152 + $0x104] sm:$0xf]
        %v258 = vld [vmem:[%s152 + $0x108] sm:$0xf]
        %v259 = vld [vmem:[%s152 + $0x10c] sm:$0xf]
        %v260 = vld [vmem:[%s152 + $0x110] sm:$0xf]
        %v261 = vld [vmem:[%s152 + $0x114] sm:$0xf]
        %v262 = vld [vmem:[%s152 + $0x118] sm:$0xf]
        %v263 = vld [vmem:[%s152 + $0x11c] sm:$0xf]
        %v264 = vld [vmem:[%s152 + $0x120] sm:$0xf]
        %v265 = vld [vmem:[%s152 + $0x124] sm:$0xf]
        %v266 = vld [vmem:[%s152 + $0x128] sm:$0xf]
        %v267 = vld [vmem:[%s152 + $0x12c] sm:$0xf]
        %v268 = vld [vmem:[%s152 + $0x130] sm:$0xf]
        %v269 = vld [vmem:[%s152 + $0x134] sm:$0xf]
        %v270 = vld [vmem:[%s152 + $0x138] sm:$0xf]
        %v271 = vld [vmem:[%s152 + $0x13c] sm:$0xf]
        %v272 = vld [vmem:[%s152 + $0x140] sm:$0xf]
        %v273 = vld [vmem:[%s152 + $0x144] sm:$0xf]
        %v274 = vld [vmem:[%s152 + $0x148] sm:$0xf]
        %v275 = vld [vmem:[%s152 + $0x14c] sm:$0xf]
        %v276 = vld [vmem:[%s152 + $0x150] sm:$0xf]
        %v277 = vld [vmem:[%s152 + $0x154] sm:$0xf]
        %v278 = vld [vmem:[%s152 + $0x158] sm:$0xf]
        %v279 = vld [vmem:[%s152 + $0x15c] sm:$0xf]
        %v280 = vld [vmem:[%s152 + $0x160] sm:$0xf]
        %v281 = vld [vmem:[%s152 + $0x164] sm:$0xf]
        %v282 = vld [vmem:[%s152 + $0x168] sm:$0xf]
        %v283 = vld [vmem:[%s152 + $0x16c] sm:$0xf]
        %v284 = vld [vmem:[%s152 + $0x170] sm:$0xf]
        %v285 = vld [vmem:[%s152 + $0x174] sm:$0xf]
        %v286 = vld [vmem:[%s152 + $0x178] sm:$0xf]
        %v287 = vld [vmem:[%s152 + $0x17c] sm:$0xf]
        %v288 = vld [vmem:[%s152 + $0x180] sm:$0xf]
        %v289 = vld [vmem:[%s152 + $0x184] sm:$0xf]
        %v290 = vld [vmem:[%s152 + $0x188] sm:$0xf]
        %v291 = vld [vmem:[%s152 + $0x18c] sm:$0xf]
        %v292 = vld [vmem:[%s152 + $0x190] sm:$0xf]
        %v293 = vld [vmem:[%s152 + $0x194] sm:$0xf]
        %v294 = vld [vmem:[%s152 + $0x198] sm:$0xf]
        %v295 = vld [vmem:[%s152 + $0x19c] sm:$0xf]
        %v296 = vld [vmem:[%s152 + $0x1a0] sm:$0xf]
        %v297 = vld [vmem:[%s152 + $0x1a4] sm:$0xf]
        %v298 = vld [vmem:[%s152 + $0x1a8] sm:$0xf]
        %v299 = vld [vmem:[%s152 + $0x1ac] sm:$0xf]
        %v300 = vld [vmem:[%s152 + $0x1b0] sm:$0xf]
        %v301 = vld [vmem:[%s152 + $0x1b4] sm:$0xf]
        %v302 = vld [vmem:[%s152 + $0x1b8] sm:$0xf]
        %v303 = vld [vmem:[%s152 + $0x1bc] sm:$0xf]
        %v304 = vld [vmem:[%s152 + $0x1c0] sm:$0xf]
        %v305 = vld [vmem:[%s152 + $0x1c4] sm:$0xf]
        %v306 = vld [vmem:[%s152 + $0x1c8] sm:$0xf]
        %v307 = vld [vmem:[%s152 + $0x1cc] sm:$0xf]
        %v308 = vld [vmem:[%s152 + $0x1d0] sm:$0xf]
        %v309 = vld [vmem:[%s152 + $0x1d4] sm:$0xf]
        %v310 = vld [vmem:[%s152 + $0x1d8] sm:$0xf]
        %v311 = vld [vmem:[%s152 + $0x1dc] sm:$0xf]
        %v312 = vld [vmem:[%s152 + $0x1e0] sm:$0xf]
        %v313 = vld [vmem:[%s152 + $0x1e4] sm:$0xf]
        %v314 = vld [vmem:[%s152 + $0x1e8] sm:$0xf]
        %v315 = vld [vmem:[%s152 + $0x1ec] sm:$0xf]
        %v316 = vld [vmem:[%s152 + $0x1f0] sm:$0xf]
        %v317 = vld [vmem:[%s152 + $0x1f4] sm:$0xf]
        %v318 = vld [vmem:[%s152 + $0x1f8] sm:$0xf]
        %v319 = vld [vmem:[%s152 + $0x1fc] sm:$0xf]
        %v336 = vunpack.c.l.b16 %v192
        %v337 = vunpack.c.l.b16 %v193
        %v338 = vunpack.c.l.b16 %v194
        %v339 = vunpack.c.l.b16 %v195
        %v340 = vunpack.c.l.b16 %v196
        %v341 = vunpack.c.l.b16 %v197
        %v342 = vunpack.c.l.b16 %v198
        %v343 = vunpack.c.l.b16 %v199
        %v344 = vunpack.c.l.b16 %v200
        %v345 = vunpack.c.l.b16 %v201
        %v346 = vunpack.c.l.b16 %v202
        %v347 = vunpack.c.l.b16 %v203
        %v348 = vunpack.c.l.b16 %v204
        %v349 = vunpack.c.l.b16 %v205
        %v350 = vunpack.c.l.b16 %v206
        %v351 = vunpack.c.l.b16 %v207
        %v352 = vpack.c.b16 %v337, %v336
        %v353 = vpack.c.b16 %v339, %v338
        %v354 = vpack.c.b16 %v341, %v340
        %v355 = vpack.c.b16 %v343, %v342
        %v356 = vpack.c.b16 %v345, %v344
        %v357 = vpack.c.b16 %v347, %v346
        %v358 = vpack.c.b16 %v349, %v348
        %v359 = vpack.c.b16 %v351, %v350
        %368 = vmatprep.subr.bf16.mxu0 0
        %369 = vmatpush1.bf16.msra.mxu0 %v352
        %370 = vmatprep.subr.bf16.mxu0 0
        %371 = vmatpush1.bf16.msra.mxu0 %v353
        %372 = vmatprep.subr.bf16.mxu0 0
        %373 = vmatpush1.bf16.msra.mxu0 %v354
        %374 = vmatprep.subr.bf16.mxu0 0
        %375 = vmatpush1.bf16.msra.mxu0 %v355
        %376 = vmatprep.subr.bf16.mxu0 0
        %377 = vmatpush1.bf16.msra.mxu0 %v356
        %378 = vmatprep.subr.bf16.mxu0 0
        %379 = vmatpush1.bf16.msra.mxu0 %v357
        %380 = vmatprep.subr.bf16.mxu0 0
        %381 = vmatpush1.bf16.msra.mxu0 %v358
        %382 = vmatprep.subr.bf16.mxu0 0
        %383 = vmatpush1.bf16.msra.mxu0 %v359
        %384 = vmatprep.subr.bf16.mxu0 0
        %385 = vmatpush1.bf16.msra.mxu0 0
        %386 = vmatprep.subr.bf16.mxu0 0
        %387 = vmatpush1.bf16.msra.mxu0 0
        %388 = vmatprep.subr.bf16.mxu0 0
        %389 = vmatpush1.bf16.msra.mxu0 0
        %390 = vmatprep.subr.bf16.mxu0 0
        %391 = vmatpush1.bf16.msra.mxu0 0
        %392 = vmatprep.subr.bf16.mxu0 0
        %393 = vmatpush1.bf16.msra.mxu0 0
        %394 = vmatprep.subr.bf16.mxu0 0
        %395 = vmatpush1.bf16.msra.mxu0 0
        %396 = vmatprep.subr.bf16.mxu0 0
        %397 = vmatpush1.bf16.msra.mxu0 0
        %398 = vmatprep.subr.bf16.mxu0 0
        %399 = vmatpush1.bf16.msra.mxu0 0
        %400 = vmatprep.mubr.bf16.mxu0 0
        %401 = vmatmul.mubr.bf16.gmra.mrb[0].mxu0 %v184
        %v402 = vpop.f32.mrb[0].mxu0
        %v403 = vadd.f32 0.0, %v402
        %v404 = vpop.f32.mrb[0].mxu0
        %v405 = vpop.f32.mrb[0].mxu0
        %v406 = vpop.f32.mrb[0].mxu0
        %407 = vdwg.mxu0
        %v424 = vunpack.c.l.b16 %v208
        %v425 = vunpack.c.l.b16 %v209
        %v426 = vunpack.c.l.b16 %v210
        %v427 = vunpack.c.l.b16 %v211
        %v428 = vunpack.c.l.b16 %v212
        %v429 = vunpack.c.l.b16 %v213
        %v430 = vunpack.c.l.b16 %v214
        %v431 = vunpack.c.l.b16 %v215
        %v432 = vunpack.c.l.b16 %v216
        %v433 = vunpack.c.l.b16 %v217
        %v434 = vunpack.c.l.b16 %v218
        %v435 = vunpack.c.l.b16 %v219
        %v436 = vunpack.c.l.b16 %v220
        %v437 = vunpack.c.l.b16 %v221
        %v438 = vunpack.c.l.b16 %v222
        %v439 = vunpack.c.l.b16 %v223
        %v440 = vpack.c.b16 %v425, %v424
        %v441 = vpack.c.b16 %v427, %v426
        %v442 = vpack.c.b16 %v429, %v428
        %v443 = vpack.c.b16 %v431, %v430
        %v444 = vpack.c.b16 %v433, %v432
        %v445 = vpack.c.b16 %v435, %v434
        %v446 = vpack.c.b16 %v437, %v436
        %v447 = vpack.c.b16 %v439, %v438
        %456 = vmatprep.subr.bf16.mxu0 0
        %457 = vmatpush1.bf16.msra.mxu0 %v440
        %458 = vmatprep.subr.bf16.mxu0 0
        %459 = vmatpush1.bf16.msra.mxu0 %v441
        %460 = vmatprep.subr.bf16.mxu0 0
        %461 = vmatpush1.bf16.msra.mxu0 %v442
        %462 = vmatprep.subr.bf16.mxu0 0
        %463 = vmatpush1.bf16.msra.mxu0 %v443
        %464 = vmatprep.subr.bf16.mxu0 0
        %465 = vmatpush1.bf16.msra.mxu0 %v444
        %466 = vmatprep.subr.bf16.mxu0 0
        %467 = vmatpush1.bf16.msra.mxu0 %v445
        %468 = vmatprep.subr.bf16.mxu0 0
        %469 = vmatpush1.bf16.msra.mxu0 %v446
        %470 = vmatprep.subr.bf16.mxu0 0
        %471 = vmatpush1.bf16.msra.mxu0 %v447
        %472 = vmatprep.subr.bf16.mxu0 0
        %473 = vmatpush1.bf16.msra.mxu0 0
        %474 = vmatprep.subr.bf16.mxu0 0
        %475 = vmatpush1.bf16.msra.mxu0 0
        %476 = vmatprep.subr.bf16.mxu0 0
        %477 = vmatpush1.bf16.msra.mxu0 0
        %478 = vmatprep.subr.bf16.mxu0 0
        %479 = vmatpush1.bf16.msra.mxu0 0
        %480 = vmatprep.subr.bf16.mxu0 0
        %481 = vmatpush1.bf16.msra.mxu0 0
        %482 = vmatprep.subr.bf16.mxu0 0
        %483 = vmatpush1.bf16.msra.mxu0 0
        %484 = vmatprep.subr.bf16.mxu0 0
        %485 = vmatpush1.bf16.msra.mxu0 0
        %486 = vmatprep.subr.bf16.mxu0 0
        %487 = vmatpush1.bf16.msra.mxu0 0
        %488 = vmatprep.mubr.bf16.mxu0 0
        %489 = vmatmul.mubr.bf16.gmra.mrb[0].mxu0 %v185
        %v490 = vpop.f32.mrb[0].mxu0
        %v491 = vadd.f32 0.0, %v490
        %v492 = vpop.f32.mrb[0].mxu0
        %v493 = vpop.f32.mrb[0].mxu0
        %v494 = vpop.f32.mrb[0].mxu0
        %495 = vdwg.mxu0
        %v512 = vunpack.c.l.b16 %v224
        %v513 = vunpack.c.l.b16 %v225
        %v514 = vunpack.c.l.b16 %v226
        %v515 = vunpack.c.l.b16 %v227
        %v516 = vunpack.c.l.b16 %v228
        %v517 = vunpack.c.l.b16 %v229
        %v518 = vunpack.c.l.b16 %v230
        %v519 = vunpack.c.l.b16 %v231
        %v520 = vunpack.c.l.b16 %v232
        %v521 = vunpack.c.l.b16 %v233
        %v522 = vunpack.c.l.b16 %v234
        %v523 = vunpack.c.l.b16 %v235
        %v524 = vunpack.c.l.b16 %v236
        %v525 = vunpack.c.l.b16 %v237
        %v526 = vunpack.c.l.b16 %v238
        %v527 = vunpack.c.l.b16 %v239
        %v528 = vpack.c.b16 %v513, %v512
        %v529 = vpack.c.b16 %v515, %v514
        %v530 = vpack.c.b16 %v517, %v516
        %v531 = vpack.c.b16 %v519, %v518
        %v532 = vpack.c.b16 %v521, %v520
        %v533 = vpack.c.b16 %v523, %v522
        %v534 = vpack.c.b16 %v525, %v524
        %v535 = vpack.c.b16 %v527, %v526
        %544 = vmatprep.subr.bf16.mxu0 0
        %545 = vmatpush1.bf16.msra.mxu0 %v528
        %546 = vmatprep.subr.bf16.mxu0 0
        %547 = vmatpush1.bf16.msra.mxu0 %v529
        %548 = vmatprep.subr.bf16.mxu0 0
        %549 = vmatpush1.bf16.msra.mxu0 %v530
        %550 = vmatprep.subr.bf16.mxu0 0
        %551 = vmatpush1.bf16.msra.mxu0 %v531
        %552 = vmatprep.subr.bf16.mxu0 0
        %553 = vmatpush1.bf16.msra.mxu0 %v532
        %554 = vmatprep.subr.bf16.mxu0 0
        %555 = vmatpush1.bf16.msra.mxu0 %v533
        %556 = vmatprep.subr.bf16.mxu0 0
        %557 = vmatpush1.bf16.msra.mxu0 %v534
        %558 = vmatprep.subr.bf16.mxu0 0
        %559 = vmatpush1.bf16.msra.mxu0 %v535
        %560 = vmatprep.subr.bf16.mxu0 0
        %561 = vmatpush1.bf16.msra.mxu0 0
        %562 = vmatprep.subr.bf16.mxu0 0
        %563 = vmatpush1.bf16.msra.mxu0 0
        %564 = vmatprep.subr.bf16.mxu0 0
        %565 = vmatpush1.bf16.msra.mxu0 0
        %566 = vmatprep.subr.bf16.mxu0 0
        %567 = vmatpush1.bf16.msra.mxu0 0
        %568 = vmatprep.subr.bf16.mxu0 0
        %569 = vmatpush1.bf16.msra.mxu0 0
        %570 = vmatprep.subr.bf16.mxu0 0
        %571 = vmatpush1.bf16.msra.mxu0 0
        %572 = vmatprep.subr.bf16.mxu0 0
        %573 = vmatpush1.bf16.msra.mxu0 0
        %574 = vmatprep.subr.bf16.mxu0 0
        %575 = vmatpush1.bf16.msra.mxu0 0
        %576 = vmatprep.mubr.bf16.mxu0 0
        %577 = vmatmul.mubr.bf16.gmra.mrb[0].mxu0 %v186
        %v578 = vpop.f32.mrb[0].mxu0
        %v579 = vadd.f32 0.0, %v578
        %v580 = vpop.f32.mrb[0].mxu0
        %v581 = vpop.f32.mrb[0].mxu0
        %v582 = vpop.f32.mrb[0].mxu0
        %583 = vdwg.mxu0
        %v600 = vunpack.c.l.b16 %v240
        %v601 = vunpack.c.l.b16 %v241
        %v602 = vunpack.c.l.b16 %v242
        %v603 = vunpack.c.l.b16 %v243
        %v604 = vunpack.c.l.b16 %v244
        %v605 = vunpack.c.l.b16 %v245
        %v606 = vunpack.c.l.b16 %v246
        %v607 = vunpack.c.l.b16 %v247
        %v608 = vunpack.c.l.b16 %v248
        %v609 = vunpack.c.l.b16 %v249
        %v610 = vunpack.c.l.b16 %v250
        %v611 = vunpack.c.l.b16 %v251
        %v612 = vunpack.c.l.b16 %v252
        %v613 = vunpack.c.l.b16 %v253
        %v614 = vunpack.c.l.b16 %v254
        %v615 = vunpack.c.l.b16 %v255
        %v616 = vpack.c.b16 %v601, %v600
        %v617 = vpack.c.b16 %v603, %v602
        %v618 = vpack.c.b16 %v605, %v604
        %v619 = vpack.c.b16 %v607, %v606
        %v620 = vpack.c.b16 %v609, %v608
        %v621 = vpack.c.b16 %v611, %v610
        %v622 = vpack.c.b16 %v613, %v612
        %v623 = vpack.c.b16 %v615, %v614
        %632 = vmatprep.subr.bf16.mxu0 0
        %633 = vmatpush1.bf16.msra.mxu0 %v616
        %634 = vmatprep.subr.bf16.mxu0 0
        %635 = vmatpush1.bf16.msra.mxu0 %v617
        %636 = vmatprep.subr.bf16.mxu0 0
        %637 = vmatpush1.bf16.msra.mxu0 %v618
        %638 = vmatprep.subr.bf16.mxu0 0
        %639 = vmatpush1.bf16.msra.mxu0 %v619
        %640 = vmatprep.subr.bf16.mxu0 0
        %641 = vmatpush1.bf16.msra.mxu0 %v620
        %642 = vmatprep.subr.bf16.mxu0 0
        %643 = vmatpush1.bf16.msra.mxu0 %v621
        %644 = vmatprep.subr.bf16.mxu0 0
        %645 = vmatpush1.bf16.msra.mxu0 %v622
        %646 = vmatprep.subr.bf16.mxu0 0
        %647 = vmatpush1.bf16.msra.mxu0 %v623
        %648 = vmatprep.subr.bf16.mxu0 0
        %649 = vmatpush1.bf16.msra.mxu0 0
        %650 = vmatprep.subr.bf16.mxu0 0
        %651 = vmatpush1.bf16.msra.mxu0 0
        %652 = vmatprep.subr.bf16.mxu0 0
        %653 = vmatpush1.bf16.msra.mxu0 0
        %654 = vmatprep.subr.bf16.mxu0 0
        %655 = vmatpush1.bf16.msra.mxu0 0
        %656 = vmatprep.subr.bf16.mxu0 0
        %657 = vmatpush1.bf16.msra.mxu0 0
        %658 = vmatprep.subr.bf16.mxu0 0
        %659 = vmatpush1.bf16.msra.mxu0 0
        %660 = vmatprep.subr.bf16.mxu0 0
        %661 = vmatpush1.bf16.msra.mxu0 0
        %662 = vmatprep.subr.bf16.mxu0 0
        %663 = vmatpush1.bf16.msra.mxu0 0
        %664 = vmatprep.mubr.bf16.mxu0 0
        %665 = vmatmul.mubr.bf16.gmra.mrb[0].mxu0 %v187
        %v666 = vpop.f32.mrb[0].mxu0
        %v667 = vadd.f32 0.0, %v666
        %v668 = vpop.f32.mrb[0].mxu0
        %v669 = vpop.f32.mrb[0].mxu0
        %v670 = vpop.f32.mrb[0].mxu0
        %671 = vdwg.mxu0
        %v688 = vunpack.c.l.b16 %v256
        %v689 = vunpack.c.l.b16 %v257
        %v690 = vunpack.c.l.b16 %v258
        %v691 = vunpack.c.l.b16 %v259
        %v692 = vunpack.c.l.b16 %v260
        %v693 = vunpack.c.l.b16 %v261
        %v694 = vunpack.c.l.b16 %v262
        %v695 = vunpack.c.l.b16 %v263
        %v696 = vunpack.c.l.b16 %v264
        %v697 = vunpack.c.l.b16 %v265
        %v698 = vunpack.c.l.b16 %v266
        %v699 = vunpack.c.l.b16 %v267
        %v700 = vunpack.c.l.b16 %v268
        %v701 = vunpack.c.l.b16 %v269
        %v702 = vunpack.c.l.b16 %v270
        %v703 = vunpack.c.l.b16 %v271
        %v704 = vpack.c.b16 %v689, %v688
        %v705 = vpack.c.b16 %v691, %v690
        %v706 = vpack.c.b16 %v693, %v692
        %v707 = vpack.c.b16 %v695, %v694
        %v708 = vpack.c.b16 %v697, %v696
        %v709 = vpack.c.b16 %v699, %v698
        %v710 = vpack.c.b16 %v701, %v700
        %v711 = vpack.c.b16 %v703, %v702
        %720 = vmatprep.subr.bf16.mxu0 0
        %721 = vmatpush1.bf16.msra.mxu0 %v704
        %722 = vmatprep.subr.bf16.mxu0 0
        %723 = vmatpush1.bf16.msra.mxu0 %v705
        %724 = vmatprep.subr.bf16.mxu0 0
        %725 = vmatpush1.bf16.msra.mxu0 %v706
        %726 = vmatprep.subr.bf16.mxu0 0
        %727 = vmatpush1.bf16.msra.mxu0 %v707
        %728 = vmatprep.subr.bf16.mxu0 0
        %729 = vmatpush1.bf16.msra.mxu0 %v708
        %730 = vmatprep.subr.bf16.mxu0 0
        %731 = vmatpush1.bf16.msra.mxu0 %v709
        %732 = vmatprep.subr.bf16.mxu0 0
        %733 = vmatpush1.bf16.msra.mxu0 %v710
        %734 = vmatprep.subr.bf16.mxu0 0
        %735 = vmatpush1.bf16.msra.mxu0 %v711
        %736 = vmatprep.subr.bf16.mxu0 0
        %737 = vmatpush1.bf16.msra.mxu0 0
        %738 = vmatprep.subr.bf16.mxu0 0
        %739 = vmatpush1.bf16.msra.mxu0 0
        %740 = vmatprep.subr.bf16.mxu0 0
        %741 = vmatpush1.bf16.msra.mxu0 0
        %742 = vmatprep.subr.bf16.mxu0 0
        %743 = vmatpush1.bf16.msra.mxu0 0
        %744 = vmatprep.subr.bf16.mxu0 0
        %745 = vmatpush1.bf16.msra.mxu0 0
        %746 = vmatprep.subr.bf16.mxu0 0
        %747 = vmatpush1.bf16.msra.mxu0 0
        %748 = vmatprep.subr.bf16.mxu0 0
        %749 = vmatpush1.bf16.msra.mxu0 0
        %750 = vmatprep.subr.bf16.mxu0 0
        %751 = vmatpush1.bf16.msra.mxu0 0
        %752 = vmatprep.mubr.bf16.mxu0 0
        %753 = vmatmul.mubr.bf16.gmra.mrb[0].mxu0 %v188
        %v754 = vpop.f32.mrb[0].mxu0
        %v755 = vadd.f32 0.0, %v754
        %v756 = vpop.f32.mrb[0].mxu0
        %v757 = vpop.f32.mrb[0].mxu0
        %v758 = vpop.f32.mrb[0].mxu0
        %759 = vdwg.mxu0
        %v776 = vunpack.c.l.b16 %v272
        %v777 = vunpack.c.l.b16 %v273
        %v778 = vunpack.c.l.b16 %v274
        %v779 = vunpack.c.l.b16 %v275
        %v780 = vunpack.c.l.b16 %v276
        %v781 = vunpack.c.l.b16 %v277
        %v782 = vunpack.c.l.b16 %v278
        %v783 = vunpack.c.l.b16 %v279
        %v784 = vunpack.c.l.b16 %v280
        %v785 = vunpack.c.l.b16 %v281
        %v786 = vunpack.c.l.b16 %v282
        %v787 = vunpack.c.l.b16 %v283
        %v788 = vunpack.c.l.b16 %v284
        %v789 = vunpack.c.l.b16 %v285
        %v790 = vunpack.c.l.b16 %v286
        %v791 = vunpack.c.l.b16 %v287
        %v792 = vpack.c.b16 %v777, %v776
        %v793 = vpack.c.b16 %v779, %v778
        %v794 = vpack.c.b16 %v781, %v780
        %v795 = vpack.c.b16 %v783, %v782
        %v796 = vpack.c.b16 %v785, %v784
        %v797 = vpack.c.b16 %v787, %v786
        %v798 = vpack.c.b16 %v789, %v788
        %v799 = vpack.c.b16 %v791, %v790
        %808 = vmatprep.subr.bf16.mxu0 0
        %809 = vmatpush1.bf16.msra.mxu0 %v792
        %810 = vmatprep.subr.bf16.mxu0 0
        %811 = vmatpush1.bf16.msra.mxu0 %v793
        %812 = vmatprep.subr.bf16.mxu0 0
        %813 = vmatpush1.bf16.msra.mxu0 %v794
        %814 = vmatprep.subr.bf16.mxu0 0
        %815 = vmatpush1.bf16.msra.mxu0 %v795
        %816 = vmatprep.subr.bf16.mxu0 0
        %817 = vmatpush1.bf16.msra.mxu0 %v796
        %818 = vmatprep.subr.bf16.mxu0 0
        %819 = vmatpush1.bf16.msra.mxu0 %v797
        %820 = vmatprep.subr.bf16.mxu0 0
        %821 = vmatpush1.bf16.msra.mxu0 %v798
        %822 = vmatprep.subr.bf16.mxu0 0
        %823 = vmatpush1.bf16.msra.mxu0 %v799
        %824 = vmatprep.subr.bf16.mxu0 0
        %825 = vmatpush1.bf16.msra.mxu0 0
        %826 = vmatprep.subr.bf16.mxu0 0
        %827 = vmatpush1.bf16.msra.mxu0 0
        %828 = vmatprep.subr.bf16.mxu0 0
        %829 = vmatpush1.bf16.msra.mxu0 0
        %830 = vmatprep.subr.bf16.mxu0 0
        %831 = vmatpush1.bf16.msra.mxu0 0
        %832 = vmatprep.subr.bf16.mxu0 0
        %833 = vmatpush1.bf16.msra.mxu0 0
        %834 = vmatprep.subr.bf16.mxu0 0
        %835 = vmatpush1.bf16.msra.mxu0 0
        %836 = vmatprep.subr.bf16.mxu0 0
        %837 = vmatpush1.bf16.msra.mxu0 0
        %838 = vmatprep.subr.bf16.mxu0 0
        %839 = vmatpush1.bf16.msra.mxu0 0
        %840 = vmatprep.mubr.bf16.mxu0 0
        %841 = vmatmul.mubr.bf16.gmra.mrb[0].mxu0 %v189
        %v842 = vpop.f32.mrb[0].mxu0
        %v843 = vadd.f32 0.0, %v842
        %v844 = vpop.f32.mrb[0].mxu0
        %v845 = vpop.f32.mrb[0].mxu0
        %v846 = vpop.f32.mrb[0].mxu0
        %847 = vdwg.mxu0
        %v864 = vunpack.c.l.b16 %v288
        %v865 = vunpack.c.l.b16 %v289
        %v866 = vunpack.c.l.b16 %v290
        %v867 = vunpack.c.l.b16 %v291
        %v868 = vunpack.c.l.b16 %v292
        %v869 = vunpack.c.l.b16 %v293
        %v870 = vunpack.c.l.b16 %v294
        %v871 = vunpack.c.l.b16 %v295
        %v872 = vunpack.c.l.b16 %v296
        %v873 = vunpack.c.l.b16 %v297
        %v874 = vunpack.c.l.b16 %v298
        %v875 = vunpack.c.l.b16 %v299
        %v876 = vunpack.c.l.b16 %v300
        %v877 = vunpack.c.l.b16 %v301
        %v878 = vunpack.c.l.b16 %v302
        %v879 = vunpack.c.l.b16 %v303
        %v880 = vpack.c.b16 %v865, %v864
        %v881 = vpack.c.b16 %v867, %v866
        %v882 = vpack.c.b16 %v869, %v868
        %v883 = vpack.c.b16 %v871, %v870
        %v884 = vpack.c.b16 %v873, %v872
        %v885 = vpack.c.b16 %v875, %v874
        %v886 = vpack.c.b16 %v877, %v876
        %v887 = vpack.c.b16 %v879, %v878
        %896 = vmatprep.subr.bf16.mxu0 0
        %897 = vmatpush1.bf16.msra.mxu0 %v880
        %898 = vmatprep.subr.bf16.mxu0 0
        %899 = vmatpush1.bf16.msra.mxu0 %v881
        %900 = vmatprep.subr.bf16.mxu0 0
        %901 = vmatpush1.bf16.msra.mxu0 %v882
        %902 = vmatprep.subr.bf16.mxu0 0
        %903 = vmatpush1.bf16.msra.mxu0 %v883
        %904 = vmatprep.subr.bf16.mxu0 0
        %905 = vmatpush1.bf16.msra.mxu0 %v884
        %906 = vmatprep.subr.bf16.mxu0 0
        %907 = vmatpush1.bf16.msra.mxu0 %v885
        %908 = vmatprep.subr.bf16.mxu0 0
        %909 = vmatpush1.bf16.msra.mxu0 %v886
        %910 = vmatprep.subr.bf16.mxu0 0
        %911 = vmatpush1.bf16.msra.mxu0 %v887
        %912 = vmatprep.subr.bf16.mxu0 0
        %913 = vmatpush1.bf16.msra.mxu0 0
        %914 = vmatprep.subr.bf16.mxu0 0
        %915 = vmatpush1.bf16.msra.mxu0 0
        %916 = vmatprep.subr.bf16.mxu0 0
        %917 = vmatpush1.bf16.msra.mxu0 0
        %918 = vmatprep.subr.bf16.mxu0 0
        %919 = vmatpush1.bf16.msra.mxu0 0
        %920 = vmatprep.subr.bf16.mxu0 0
        %921 = vmatpush1.bf16.msra.mxu0 0
        %922 = vmatprep.subr.bf16.mxu0 0
        %923 = vmatpush1.bf16.msra.mxu0 0
        %924 = vmatprep.subr.bf16.mxu0 0
        %925 = vmatpush1.bf16.msra.mxu0 0
        %926 = vmatprep.subr.bf16.mxu0 0
        %927 = vmatpush1.bf16.msra.mxu0 0
        %928 = vmatprep.mubr.bf16.mxu0 0
        %929 = vmatmul.mubr.bf16.gmra.mrb[0].mxu0 %v190
        %v930 = vpop.f32.mrb[0].mxu0
        %v931 = vadd.f32 0.0, %v930
        %v932 = vpop.f32.mrb[0].mxu0
        %v933 = vpop.f32.mrb[0].mxu0
        %v934 = vpop.f32.mrb[0].mxu0
        %935 = vdwg.mxu0
        %v952 = vunpack.c.l.b16 %v304
        %v953 = vunpack.c.l.b16 %v305
        %v954 = vunpack.c.l.b16 %v306
        %v955 = vunpack.c.l.b16 %v307
        %v956 = vunpack.c.l.b16 %v308
        %v957 = vunpack.c.l.b16 %v309
        %v958 = vunpack.c.l.b16 %v310
        %v959 = vunpack.c.l.b16 %v311
        %v960 = vunpack.c.l.b16 %v312
        %v961 = vunpack.c.l.b16 %v313
        %v962 = vunpack.c.l.b16 %v314
        %v963 = vunpack.c.l.b16 %v315
        %v964 = vunpack.c.l.b16 %v316
        %v965 = vunpack.c.l.b16 %v317
        %v966 = vunpack.c.l.b16 %v318
        %v967 = vunpack.c.l.b16 %v319
        %v968 = vpack.c.b16 %v953, %v952
        %v969 = vpack.c.b16 %v955, %v954
        %v970 = vpack.c.b16 %v957, %v956
        %v971 = vpack.c.b16 %v959, %v958
        %v972 = vpack.c.b16 %v961, %v960
        %v973 = vpack.c.b16 %v963, %v962
        %v974 = vpack.c.b16 %v965, %v964
        %v975 = vpack.c.b16 %v967, %v966
        %984 = vmatprep.subr.bf16.mxu0 0
        %985 = vmatpush1.bf16.msra.mxu0 %v968
        %986 = vmatprep.subr.bf16.mxu0 0
        %987 = vmatpush1.bf16.msra.mxu0 %v969
        %988 = vmatprep.subr.bf16.mxu0 0
        %989 = vmatpush1.bf16.msra.mxu0 %v970
        %990 = vmatprep.subr.bf16.mxu0 0
        %991 = vmatpush1.bf16.msra.mxu0 %v971
        %992 = vmatprep.subr.bf16.mxu0 0
        %993 = vmatpush1.bf16.msra.mxu0 %v972
        %994 = vmatprep.subr.bf16.mxu0 0
        %995 = vmatpush1.bf16.msra.mxu0 %v973
        %996 = vmatprep.subr.bf16.mxu0 0
        %997 = vmatpush1.bf16.msra.mxu0 %v974
        %998 = vmatprep.subr.bf16.mxu0 0
        %999 = vmatpush1.bf16.msra.mxu0 %v975
        %1000 = vmatprep.subr.bf16.mxu0 0
        %1001 = vmatpush1.bf16.msra.mxu0 0
        %1002 = vmatprep.subr.bf16.mxu0 0
        %1003 = vmatpush1.bf16.msra.mxu0 0
        %1004 = vmatprep.subr.bf16.mxu0 0
        %1005 = vmatpush1.bf16.msra.mxu0 0
        %1006 = vmatprep.subr.bf16.mxu0 0
        %1007 = vmatpush1.bf16.msra.mxu0 0
        %1008 = vmatprep.subr.bf16.mxu0 0
        %1009 = vmatpush1.bf16.msra.mxu0 0
        %1010 = vmatprep.subr.bf16.mxu0 0
        %1011 = vmatpush1.bf16.msra.mxu0 0
        %1012 = vmatprep.subr.bf16.mxu0 0
        %1013 = vmatpush1.bf16.msra.mxu0 0
        %1014 = vmatprep.subr.bf16.mxu0 0
        %1015 = vmatpush1.bf16.msra.mxu0 0
        %1016 = vmatprep.mubr.bf16.mxu0 0
        %1017 = vmatmul.mubr.bf16.gmra.mrb[0].mxu0 %v191
        %v1018 = vpop.f32.mrb[0].mxu0
        %v1019 = vadd.f32 0.0, %v1018
        %v1020 = vpop.f32.mrb[0].mxu0
        %v1021 = vpop.f32.mrb[0].mxu0
        %v1022 = vpop.f32.mrb[0].mxu0
        %1023 = vdwg.mxu0
        %v1024 = vmul.f32 %v403, %v403
        %v1025 = vmul.f32 %v491, %v491
        %v1026 = vmul.f32 %v579, %v579
        %v1027 = vmul.f32 %v667, %v667
        %v1028 = vmul.f32 %v755, %v755
        %v1029 = vmul.f32 %v843, %v843
        %v1030 = vmul.f32 %v931, %v931
        %v1031 = vmul.f32 %v1019, %v1019
        %v1040 = vrot.slane %v1025, 7
        %vm1041 = vcmask 1041409
        %v1042 = vsel %vm1041, %v1040, %v1024
        %v1043 = vrot.slane %v1026, 6
        %vm1044 = vcmask 1042434
        %v1045 = vsel %vm1044, %v1043, %v1042
        %v1046 = vrot.slane %v1027, 5
        %vm1047 = vcmask 1043459
        %v1048 = vsel %vm1047, %v1046, %v1045
        %v1049 = vrot.slane %v1028, 4
        %vm1050 = vcmask 1044484
        %v1051 = vsel %vm1050, %v1049, %v1048
        %v1052 = vrot.slane %v1029, 3
        %vm1053 = vcmask 1045509
        %v1054 = vsel %vm1053, %v1052, %v1051
        %v1055 = vrot.slane %v1030, 2
        %vm1056 = vcmask 1046534
        %v1057 = vsel %vm1056, %v1055, %v1054
        %v1058 = vrot.slane %v1031, 1
        %vm1059 = vcmask 1047559
        %v1060 = vsel %vm1059, %v1058, %v1057
        %1062 = vadd.xlane.f32.xlu0 %v1060
        %v1063 = vpop.xlane.xlu0 %1062
        %v1064 = vmax.f32 %v1063, 1e-24
        %v1065 = vrsqrt.pop %v1064
        %v1067 = vrot.slane %v1065, 1
        %v1068 = vrot.slane %v1065, 2
        %v1069 = vrot.slane %v1065, 3
        %v1070 = vrot.slane %v1065, 4
        %v1071 = vrot.slane %v1065, 5
        %v1072 = vrot.slane %v1065, 6
        %v1073 = vrot.slane %v1065, 7
        %v1082 = vmul.f32 %v403, %v1065
        %v1083 = vmul.f32 %v491, %v1067
        %v1084 = vmul.f32 %v579, %v1068
        %v1085 = vmul.f32 %v667, %v1069
        %v1086 = vmul.f32 %v755, %v1070
        %v1087 = vmul.f32 %v843, %v1071
        %v1088 = vmul.f32 %v931, %v1072
        %v1089 = vmul.f32 %v1019, %v1073
        %v1098 = vrot.slane %v1083, 7
        %v1099 = vsel %vm1041, %v1098, %v1082
        %v1100 = vrot.slane %v1084, 6
        %v1101 = vsel %vm1044, %v1100, %v1099
        %v1102 = vrot.slane %v1085, 5
        %v1103 = vsel %vm1047, %v1102, %v1101
        %v1104 = vrot.slane %v1086, 4
        %v1105 = vsel %vm1050, %v1104, %v1103
        %v1106 = vrot.slane %v1087, 3
        %v1107 = vsel %vm1053, %v1106, %v1105
        %v1108 = vrot.slane %v1088, 2
        %v1109 = vsel %vm1056, %v1108, %v1107
        %v1110 = vrot.slane %v1089, 1
        %v1111 = vsel %vm1059, %v1110, %v1109
        %1113 = vst [vmem:[%s176] sm:$0xff] %v1111
        %s1114 = sand.u32 %s79, 1
        %s1115 = scalar_lea.sflag [#allocation4], %s1114
        %s1116 = sand.u32 %s79, 1
        %s1117 = smul.addr %s1116, 8
        %s1118 = scalar_lea.vmem [#allocation5], %s1117
        // Predicated region
        $region33: #{tpu_custom_call.1} parent=27 // pred_check
          %p1119 = pneg %p89
        $region34: #{tpu_custom_call.1} parent=27 // pred_check_branch
          %1121 = sbr.rel (%p1119) target = $region36
        $region35: #{tpu_custom_call.1} parent=27 // pred_region
          %s1123 = ssub.s32 128, 128
          %1124 = vsyncadd %s1115, %s1123
          %s1125 = smul.addr %s19, 128
          %s1126 = scalar_lea.hbm %s2, %s1125
          %s1128 = sshll.u32 %s1118, 4
          %s1129 = int_to_ptr.vmem [resolvable:$true] %s1128
          %1131 = dma.vmem_to_hbm [thread:$0]  %s1129, 128, %s1126, %s1115
        $region36: #{tpu_custom_call.1} parent=27 // pred_fallthru
          _
      $region28: #{tpu_custom_call.1} parent=5 // pred_fallthru
        _
      %p1132 = scmp.le.s32.totalorder 2, %s14
      // Predicated region
      $region37: #{tpu_custom_call.1} parent=5 // pred_check
        %p1133 = pneg %p1132
      $region38: #{tpu_custom_call.1} parent=5 // pred_check_branch
        %1135 = sbr.rel (%p1133) target = $region40
      $region39: #{tpu_custom_call.1} parent=5 // pred_region
        %s1136 = ssub.s32 %s14, 2
        // Predicated region
        $region41: #{tpu_custom_call.1} parent=39 // pred_check
          %p1137 = pneg %p95
        $region42: #{tpu_custom_call.1} parent=39 // pred_check_branch
          %1139 = sbr.rel (%p1137) target = $region44
        $region43: #{tpu_custom_call.1} parent=39 // pred_region
          %s1140 = sand.u32 %s80, 1
          %s1141 = scalar_lea.sflag [#allocation4], %s1140
          %s1142 = sand.u32 %s80, 1
          %s1143 = smul.addr %s1142, 8
          %s1144 = scalar_lea.vmem [#allocation5], %s1143
          %1145 = dma.done %s1141, 128
        $region44: #{tpu_custom_call.1} parent=39 // pred_fallthru
          _
      $region40: #{tpu_custom_call.1} parent=5 // pred_fallthru
        _
    $region6: #{tpu_custom_call.1} parent=1 // loop_footer
      %s18 = sadd.s32 1, %s14
    $region7: #{tpu_custom_call.1} parent=1 // loop_footer_branch
      %13 = sbr.rel target = $region3
    $region8: #{tpu_custom_call.1} parent=1 // loop_exit
      _
    %1146 = vsyncpa [#allocation3], 1
    %s1147 = scalar_lea.sflag [#allocation3], 1
    %1148 = vsyncpa %s1147, 1
    %1149 = vsyncpa [#allocation4], 1
    %s1150 = scalar_lea.sflag [#allocation4], 1
    %1151 = vsyncpa %s1150, 1

</llo_original>
